<compile_context>
chip_gen: v6e
topology: v6e:2x2x1
jax: 0.10.0
libtpu: 0.0.40
codegen_flags: <defaults>
</compile_context>

<pallas_src>
import functools

import jax
import jax.numpy as jnp
from jax.experimental import pallas as pl
from jax.experimental.pallas import tpu as pltpu


def _round_up(a: int, m: int) -> int:
    return ((a + m - 1) // m) * m


def _vmem_capacity_bytes() -> int:
    """Physical VMEM per TensorCore (128 MiB v5e/v6e, 64 MiB v7x)."""
    try:
        return int(pltpu.get_tpu_info().vmem_capacity_bytes)
    except Exception:
        return 64 * 1024 * 1024  # conservative (v7x)


# -----------------------------------------------------------------------------
# Kernels
# -----------------------------------------------------------------------------
def _resident_w_kernel(x_ref, w_ref, b_ref, y_ref, logit_ref):
    """W (K_pad, N_pad) bf16 fully VMEM-resident; full-K matmul per batch tile."""
    logit = jnp.dot(
        x_ref[...].astype(jnp.bfloat16),       # MXU is native bf16
        w_ref[...],                            # pre-cast bf16, pre-transposed
        preferred_element_type=jnp.float32,    # f32 accumulation
    ) + b_ref[...]                             # padded cols carry -1e30 bias
    logit_ref[...] = logit

    # Numerically stable softmax; reciprocal on the EUP slot.
    m = jnp.max(logit, axis=-1, keepdims=True)
    e = jnp.exp(logit - m)
    denom = jnp.sum(e, axis=-1, keepdims=True)
    y_ref[...] = e * pl.reciprocal(denom, approx=True)


def _ktiled_kernel(x_ref, w_ref, b_ref, y_ref, logit_ref):
    """K-tiled reduction; accumulate directly into the K-invariant logit block."""
    k = pl.program_id(1)

    @pl.when(k == 0)
    def _():
        logit_ref[...] = jnp.zeros_like(logit_ref)

    logit_ref[...] += jnp.dot(
        x_ref[...].astype(jnp.bfloat16),
        w_ref[...],
        preferred_element_type=jnp.float32,
    )

    @pl.when(k == pl.num_programs(1) - 1)
    def _():
        logit = logit_ref[...] + b_ref[...]
        logit_ref[...] = logit
        m = jnp.max(logit, axis=-1, keepdims=True)
        e = jnp.exp(logit - m)
        denom = jnp.sum(e, axis=-1, keepdims=True)
        y_ref[...] = e * pl.reciprocal(denom, approx=True)


# -----------------------------------------------------------------------------
# One-time parameter preparation (do NOT run per forward call)
# -----------------------------------------------------------------------------
def prepare_classifier_params(weight, bias):
    """Pad K/N to multiples of 128, cast W to bf16 and transpose to (K_pad, N_pad);
    pad bias columns with -1e30 (f32) so padded logits softmax to exactly 0."""
    N, K = weight.shape
    N_pad = _round_up(N, 128)
    K_pad = _round_up(K, 128)
    w_t = jnp.zeros((K_pad, N_pad), jnp.bfloat16)
    w_t = w_t.at[:K, :N].set(weight.astype(jnp.bfloat16).T)
    b_p = jnp.full((1, N_pad), jnp.float32(-1e30))
    b_p = b_p.at[0, :N].set(bias.astype(jnp.float32))
    return w_t, b_p


# -----------------------------------------------------------------------------
# Forward
# -----------------------------------------------------------------------------
@functools.partial(jax.jit, static_argnames=("out_dim", "force_ktiled", "tk"))
def classifier_forward(x, w_t, b_p, *, out_dim, force_ktiled=False, tk=None):
    """x: (B, in_dim) f32.  w_t: (K_pad, N_pad) bf16 from prepare_classifier_params.
    b_p: (1, N_pad) f32.  Returns (softmax, logit), both f32 (B, out_dim)."""
    B, K = x.shape
    K_pad, N_pad = w_t.shape
    assert K <= K_pad and out_dim <= N_pad

    vmem_cap = _vmem_capacity_bytes()
    vmem_limit = min(int(vmem_cap * 0.75), 100 * 1024 * 1024)  # headroom for compiler
    budget = int(vmem_limit * 0.8)                             # what we plan tiles into

    # ---- Batch tile: sublane-aligned; larger on 128-MiB-VMEM parts (v5e/v6e). ----
    tb_cap = 512 if vmem_cap >= (100 << 20) else 256
    TB = min(_round_up(B, 8), tb_cap)
    # Shrink TB if the two (TB, N_pad) f32 output blocks (double-buffered) would
    # dominate VMEM (large out_dim; matters most on v7x's 64 MiB).
    while TB > 8 and (4 * TB * N_pad * 4) > budget // 2:
        TB = max(8, _round_up(TB // 2, 8))
    B_pad = _round_up(B, TB)

    x_p = jnp.pad(x.astype(jnp.float32), ((0, B_pad - B), (0, K_pad - K)))

    out_shapes = (
        jax.ShapeDtypeStruct((B_pad, N_pad), jnp.float32),  # y (softmax)
        jax.ShapeDtypeStruct((B_pad, N_pad), jnp.float32),  # logit
    )

    out_bytes = 2 * 2 * TB * N_pad * 4           # y + logit, double-buffered f32
    x_tile_bytes = 2 * TB * K_pad * 4            # double-buffered f32 x tile
    w_resident_bytes = 2 * K_pad * N_pad * 2     # bf16 W, assume double-buffered

    use_resident = (not force_ktiled) and (
        w_resident_bytes + out_bytes + x_tile_bytes <= budget)

    if use_resident:
        # Path A: W DMA'd once and held resident; no K axis, no accumulator RMW.
        y_pad, logit_pad = pl.pallas_call(
            _resident_w_kernel,
            out_shape=out_shapes,
            grid_spec=pltpu.PrefetchScalarGridSpec(
                num_scalar_prefetch=0,
                grid=(B_pad // TB,),
                in_specs=[
                    pl.BlockSpec((TB, K_pad), lambda i: (i, 0)),      # x tile
                    pl.BlockSpec((K_pad, N_pad), lambda i: (0, 0)),   # W (resident)
                    pl.BlockSpec((1, N_pad), lambda i: (0, 0)),       # bias
                ],
                out_specs=[
                    pl.BlockSpec((TB, N_pad), lambda i: (i, 0)),      # y
                    pl.BlockSpec((TB, N_pad), lambda i: (i, 0)),      # logit
                ],
            ),
            compiler_params=pltpu.CompilerParams(
                dimension_semantics=("parallel",),
                vmem_limit_bytes=vmem_limit,
            ),
        )(x_p, w_t, b_p)
    else:
        # Path B: tile K (reduction axis last); logit block is K-invariant so it
        # stays VMEM-resident and acts as the accumulator.
        if tk is not None:
            TK = tk
        else:
            TK = 1024
            while TK > 128 and (2 * TK * N_pad * 2 + 2 * TB * TK * 4) > max(
                    budget - out_bytes, 1 << 20):
                TK //= 2
            TK = min(TK, K_pad)
            while K_pad % TK != 0:
                TK //= 2
        assert K_pad % TK == 0, "TK must divide K_pad"

        y_pad, logit_pad = pl.pallas_call(
            _ktiled_kernel,
            out_shape=out_shapes,
            grid_spec=pltpu.PrefetchScalarGridSpec(
                num_scalar_prefetch=0,
                grid=(B_pad // TB, K_pad // TK),
                in_specs=[
                    pl.BlockSpec((TB, TK), lambda i, k: (i, k)),      # x tile
                    pl.BlockSpec((TK, N_pad), lambda i, k: (k, 0)),   # W panel
                    pl.BlockSpec((1, N_pad), lambda i, k: (0, 0)),    # bias
                ],
                out_specs=[
                    pl.BlockSpec((TB, N_pad), lambda i, k: (i, 0)),   # y
                    pl.BlockSpec((TB, N_pad), lambda i, k: (i, 0)),   # logit
                ],
            ),
            compiler_params=pltpu.CompilerParams(
                dimension_semantics=("parallel", "arbitrary"),
                vmem_limit_bytes=vmem_limit,
            ),
        )(x_p, w_t, b_p)

    return y_pad[:B, :out_dim], logit_pad[:B, :out_dim]


# -----------------------------------------------------------------------------
# Reference (f32 math on the same bf16-rounded operands the MXU consumes)
# -----------------------------------------------------------------------------
def _reference(x, weight, bias):
    xb = x.astype(jnp.bfloat16).astype(jnp.float32)
    wb = weight.astype(jnp.bfloat16).astype(jnp.float32)
    logit = xb @ wb.T + bias.astype(jnp.float32)[None, :]
    m = jnp.max(logit, axis=-1, keepdims=True)
    e = jnp.exp(logit - m)
    y = e / jnp.sum(e, axis=-1, keepdims=True)
    return y, logit


if __name__ == "__main__":
    key = jax.random.PRNGKey(0)
    k_x, k_w, k_b, k_x2, k_w2 = jax.random.split(key, 5)

    # --- Test 1: small classifier head (resident-W fast path). ---
    B, in_dim, out_dim = 8, 32, 16
    bound = 1.0 / (in_dim ** 0.5)
    x = jax.random.normal(k_x, (B, in_dim), dtype=jnp.float32)
    weight = jax.random.uniform(k_w, (out_dim, in_dim), minval=-bound,
                                maxval=bound, dtype=jnp.float32)
    bias = jax.random.uniform(k_b, (out_dim,), minval=-bound,
                              maxval=bound, dtype=jnp.float32)

    w_t, b_p = prepare_classifier_params(weight, bias)   # one-time prep
    y, logit = classifier_forward(x, w_t, b_p, out_dim=out_dim)
    jax.block_until_ready((y, logit))

    y_ref, logit_ref = _reference(x, weight, bias)
    assert jnp.allclose(logit, logit_ref, atol=1e-4, rtol=1e-4), "logit mismatch (resident)"
    assert jnp.allclose(y, y_ref, atol=1e-3, rtol=1e-3), "softmax mismatch (resident)"
    assert jnp.allclose(jnp.sum(y, axis=-1), 1.0, atol=2e-3), "rows must sum to ~1"

    # --- Test 2: exercise the K-tiled accumulation path (2 K steps). ---
    in_dim2 = 256
    bound2 = 1.0 / (in_dim2 ** 0.5)
    x2 = jax.random.normal(k_x2, (B, in_dim2), dtype=jnp.float32)
    weight2 = jax.random.uniform(k_w2, (out_dim, in_dim2), minval=-bound2,
                                 maxval=bound2, dtype=jnp.float32)
    w_t2, b_p2 = prepare_classifier_params(weight2, bias)
    y2, logit2 = classifier_forward(x2, w_t2, b_p2, out_dim=out_dim,
                                    force_ktiled=True, tk=128)
    jax.block_until_ready((y2, logit2))

    y2_ref, logit2_ref = _reference(x2, weight2, bias)
    assert jnp.allclose(logit2, logit2_ref, atol=2e-4, rtol=2e-4), "logit mismatch (k-tiled)"
    assert jnp.allclose(y2, y2_ref, atol=1e-3, rtol=1e-3), "softmax mismatch (k-tiled)"
    assert jnp.allclose(jnp.sum(y2, axis=-1), 1.0, atol=2e-3), "rows must sum to ~1"

    print("KERNEL_OK")
</pallas_src>

<mosaic_0001>
module attributes {stable_mosaic.version = 11 : i64} {
  func.func @_resident_w_kernel(%arg0: i32, %arg1: memref<8x128xf32, #tpu.memory_space<vmem>>, %arg2: memref<128x128xbf16, #tpu.memory_space<vmem>>, %arg3: memref<1x128xf32, #tpu.memory_space<vmem>>, %arg4: memref<8x128xf32, #tpu.memory_space<vmem>>, %arg5: memref<8x128xf32, #tpu.memory_space<vmem>>) attributes {dimension_semantics = [#tpu.dimension_semantics<parallel>], iteration_bounds = array<i64: 1>, scalar_prefetch = 0 : i64, scratch_operands = 0 : i64, tpu.core_type = #tpu.core_type<tc>, window_params = [{transform_indices = @transform_0, window_bounds = array<i64: 8, 128>}, {pipeline_mode = #tpu.pipeline_mode<synchronous>, transform_indices = @transform_1, window_bounds = array<i64: 128, 128>}, {pipeline_mode = #tpu.pipeline_mode<synchronous>, transform_indices = @transform_2, window_bounds = array<i64: 1, 128>}, {transform_indices = @transform_3, window_bounds = array<i64: 8, 128>}, {transform_indices = @transform_4, window_bounds = array<i64: 8, 128>}]} {
    %c0 = arith.constant 0 : index
    %c0_0 = arith.constant 0 : index
    %0 = vector.load %arg1[%c0, %c0_0] : memref<8x128xf32, #tpu.memory_space<vmem>>, vector<8x128xf32>
    %1 = arith.truncf %0 : vector<8x128xf32> to vector<8x128xbf16>
    %c0_1 = arith.constant 0 : index
    %c0_2 = arith.constant 0 : index
    %2 = vector.load %arg2[%c0_1, %c0_2] : memref<128x128xbf16, #tpu.memory_space<vmem>>, vector<128x128xbf16>
    %cst = arith.constant dense<0.000000e+00> : vector<8x128xf32>
    %3 = tpu.matmul %1, %2, %cst {dimension_numbers = #tpu.dot_dimension_numbers<[1], [0], [0], [1], [0, 0, 1, 1], [], []>} : vector<8x128xbf16>, vector<128x128xbf16>, vector<8x128xf32> -> vector<8x128xf32>
    %c0_3 = arith.constant 0 : index
    %c0_4 = arith.constant 0 : index
    %4 = vector.load %arg3[%c0_3, %c0_4] : memref<1x128xf32, #tpu.memory_space<vmem>>, vector<1x128xf32>
    %5 = vector.broadcast %4 : vector<1x128xf32> to vector<8x128xf32>
    %6 = arith.addf %3, %5 : vector<8x128xf32>
    %c0_5 = arith.constant 0 : index
    %c0_6 = arith.constant 0 : index
    %7 = vector.load %arg5[%c0_5, %c0_6] : memref<8x128xf32, #tpu.memory_space<vmem>>, vector<8x128xf32>
    tpu.vector_store %arg5[%c0_5, %c0_6], %6 {strides = array<i32>} : memref<8x128xf32, #tpu.memory_space<vmem>>, vector<8x128xf32>,
    %cst_7 = arith.constant dense<0xFF800000> : vector<8xf32>
    %8 = vector.multi_reduction <maximumf>, %6, %cst_7 [1] : vector<8x128xf32> to vector<8xf32>
    %9 = vector.shape_cast %8 : vector<8xf32> to vector<8x1xf32>
    %10 = vector.broadcast %9 : vector<8x1xf32> to vector<8x128xf32>
    %11 = arith.subf %6, %10 : vector<8x128xf32>
    %12 = math.exp %11 : vector<8x128xf32>
    %cst_8 = arith.constant dense<0.000000e+00> : vector<8xf32>
    %13 = vector.multi_reduction <add>, %12, %cst_8 [1] : vector<8x128xf32> to vector<8xf32>
    %14 = vector.shape_cast %13 : vector<8xf32> to vector<8x1xf32>
    %15 = tpu.reciprocal %14 {approx = true} : vector<8x1xf32> -> vector<8x1xf32>
    %16 = vector.broadcast %15 : vector<8x1xf32> to vector<8x128xf32>
    %17 = arith.mulf %12, %16 : vector<8x128xf32>
    %c0_9 = arith.constant 0 : index
    %c0_10 = arith.constant 0 : index
    %18 = vector.load %arg4[%c0_9, %c0_10] : memref<8x128xf32, #tpu.memory_space<vmem>>, vector<8x128xf32>
    tpu.vector_store %arg4[%c0_9, %c0_10], %17 {strides = array<i32>} : memref<8x128xf32, #tpu.memory_space<vmem>>, vector<8x128xf32>,
    return
  }
  func.func @transform_0(%arg0: i32) -> (i32, i32) {
    %c0_i32 = arith.constant 0 : i32
    %c0_i32_0 = arith.constant 0 : i32
    return %arg0, %c0_i32 : i32, i32
  }
  func.func @transform_1(%arg0: i32) -> (i32, i32) {
    %c0_i32 = arith.constant 0 : i32
    %c0_i32_0 = arith.constant 0 : i32
    %c0_i32_1 = arith.constant 0 : i32
    return %c0_i32, %c0_i32_0 : i32, i32
  }
  func.func @transform_2(%arg0: i32) -> (i32, i32) {
    %c0_i32 = arith.constant 0 : i32
    %c0_i32_0 = arith.constant 0 : i32
    %c0_i32_1 = arith.constant 0 : i32
    return %c0_i32, %c0_i32_0 : i32, i32
  }
  func.func @transform_3(%arg0: i32) -> (i32, i32) {
    %c0_i32 = arith.constant 0 : i32
    %c0_i32_0 = arith.constant 0 : i32
    return %arg0, %c0_i32 : i32, i32
  }
  func.func @transform_4(%arg0: i32) -> (i32, i32) {
    %c0_i32 = arith.constant 0 : i32
    %c0_i32_0 = arith.constant 0 : i32
    return %arg0, %c0_i32 : i32, i32
  }
}

</mosaic_0001>

<llo_original>
// kernel: classifier_forward.1
$region0: #{classifier_forward.1}
  #allocation0 [shape = 'u32[]', space=smem, size = 0x4, offset = 0x4, fixed_abs, tag = 'smem constant byte address 0x4 - core index']
  #allocation1 [shape = 'u32[144,128]{1,0:T(1,128)}', space=vmem, size = 0x12000, scoped, tag = 'internal scratch']
  %s0 = inlined_call_operand.vmem [shape: f32[8,128], index: 0, kind: input, shape index: {}]
  %s1 = inlined_call_operand.hbm [shape: bf16[128,128], index: 1, kind: input, shape index: {}]
  %s2 = inlined_call_operand.vmem [shape: f32[1,128], index: 2, kind: input, shape index: {}]
  %s3 = inlined_call_operand.hbm [shape: f32[8,128], index: 3, kind: output, shape index: {0}]
  %s4 = inlined_call_operand.hbm [shape: f32[8,128], index: 4, kind: output, shape index: {1}]
  %5 = xla_tuple %s3, %s4
  %s6 = sld [smem:[#allocation0]]
  $region34: #{classifier_forward.1} parent=0
    _
  %s8 = ssub.s32 1, %s6
  %s9 = scalar_select 0, %s8, %s6
  $region1: #{classifier_forward.1} parent=0
    #allocation2 [shape = 'u8[32768]{0}', space=vmem, size = 0x8000, scoped, tag = 'input window, operand 1, single buffered']
    #allocation3 [shape = 's32[1]{0}', space=sflag, size = 0x4, scoped, tag = 'scoped memory for classifier_forward.1']
    #allocation4 [shape = 's32[1]{0}', space=sflag, size = 0x4, scoped, tag = 'scoped memory for classifier_forward.1']
    #allocation5 [shape = 'u8[4096]{0}', space=vmem, size = 0x1000, scoped, tag = 'output window, operand 0, single buffered']
    #allocation6 [shape = 'u8[4096]{0}', space=vmem, size = 0x1000, scoped, tag = 'output window, operand 1, single buffered']
    #allocation7 [shape = 's32[1]{0}', space=sflag, size = 0x4, scoped, tag = 'scoped memory for classifier_forward.1']
    %10 = vsyncpa [#allocation3], 0
    %11 = vsyncpa [#allocation4], 0
    %12 = vsyncpa [#allocation7], 0
    // Predicated region
    $region2: #{classifier_forward.1} parent=1 // pred_check
      _
    $region3: #{classifier_forward.1} parent=1 // pred_check_branch
      %14 = sbr.rel (0) target = $region5
    $region4: #{classifier_forward.1} parent=1 // pred_region
      _
    $region5: #{classifier_forward.1} parent=1 // pred_fallthru
      _
    // Predicated region
    $region6: #{classifier_forward.1} parent=1 // pred_check
      _
    $region7: #{classifier_forward.1} parent=1 // pred_check_branch
      %16 = sbr.rel (0) target = $region9
    $region8: #{classifier_forward.1} parent=1 // pred_region
      %s18 = ssub.s32 1024, 1024
      %19 = vsyncadd [#allocation3], %s18
      %s20 = sshll.u32 [#allocation2], 4
      %s21 = int_to_ptr.vmem [resolvable:$true] %s20
      %26 = dma.hbm_to_vmem [thread:$0]  %s1, 1024, %s21, [#allocation3], 64, 64, 4
    $region9: #{classifier_forward.1} parent=1 // pred_fallthru
      _
    // Predicated region
    $region10: #{classifier_forward.1} parent=1 // pred_check
      _
    $region11: #{classifier_forward.1} parent=1 // pred_check_branch
      %28 = sbr.rel (0) target = $region13
    $region12: #{classifier_forward.1} parent=1 // pred_region
      _
    $region13: #{classifier_forward.1} parent=1 // pred_fallthru
      _
    // Predicated region
    $region14: #{classifier_forward.1} parent=1 // pred_check
      _
    $region15: #{classifier_forward.1} parent=1 // pred_check_branch
      %30 = sbr.rel (0) target = $region17
    $region16: #{classifier_forward.1} parent=1 // pred_region
      %31 = dma.done [#allocation3], 1024
    $region17: #{classifier_forward.1} parent=1 // pred_fallthru
      _
    %v33 = vld [vmem:[%s0] sm:$0xff]
    %v34 = vpack.c.bf16 %v33, %v33
    %v35 = vld [vmem:[#allocation2] sm:$0xf]
    %v36 = vld [vmem:[#allocation2 + $0x4] sm:$0xf]
    %v37 = vld [vmem:[#allocation2 + $0x8] sm:$0xf]
    %v38 = vld [vmem:[#allocation2 + $0xc] sm:$0xf]
    %v39 = vld [vmem:[#allocation2 + $0x10] sm:$0xf]
    %v40 = vld [vmem:[#allocation2 + $0x14] sm:$0xf]
    %v41 = vld [vmem:[#allocation2 + $0x18] sm:$0xf]
    %v42 = vld [vmem:[#allocation2 + $0x1c] sm:$0xf]
    %v43 = vld [vmem:[#allocation2 + $0x20] sm:$0xf]
    %v44 = vld [vmem:[#allocation2 + $0x24] sm:$0xf]
    %v45 = vld [vmem:[#allocation2 + $0x28] sm:$0xf]
    %v46 = vld [vmem:[#allocation2 + $0x2c] sm:$0xf]
    %v47 = vld [vmem:[#allocation2 + $0x30] sm:$0xf]
    %v48 = vld [vmem:[#allocation2 + $0x34] sm:$0xf]
    %v49 = vld [vmem:[#allocation2 + $0x38] sm:$0xf]
    %v50 = vld [vmem:[#allocation2 + $0x3c] sm:$0xf]
    %v51 = vld [vmem:[%s2] sm:$0x1]
    %v53 = vlaneseq
    %v54 = vshrl.u32 %v53, 7
    %v55 = vsub.s32 0, %v54
    %v56 = vrot.slane %v51, %v55
    %v74 = vunpack.c.l.b16 %v35
    %v75 = vunpack.c.l.b16 %v36
    %v76 = vunpack.c.l.b16 %v37
    %v77 = vunpack.c.l.b16 %v38
    %v78 = vunpack.c.l.b16 %v39
    %v79 = vunpack.c.l.b16 %v40
    %v80 = vunpack.c.l.b16 %v41
    %v81 = vunpack.c.l.b16 %v42
    %v82 = vunpack.c.l.b16 %v43
    %v83 = vunpack.c.l.b16 %v44
    %v84 = vunpack.c.l.b16 %v45
    %v85 = vunpack.c.l.b16 %v46
    %v86 = vunpack.c.l.b16 %v47
    %v87 = vunpack.c.l.b16 %v48
    %v88 = vunpack.c.l.b16 %v49
    %v89 = vunpack.c.l.b16 %v50
    %v90 = vpack.c.b16 %v75, %v74
    %v91 = vpack.c.b16 %v77, %v76
    %v92 = vpack.c.b16 %v79, %v78
    %v93 = vpack.c.b16 %v81, %v80
    %v94 = vpack.c.b16 %v83, %v82
    %v95 = vpack.c.b16 %v85, %v84
    %v96 = vpack.c.b16 %v87, %v86
    %v97 = vpack.c.b16 %v89, %v88
    %106 = vmatprep.subr.bf16.mxu0 0
    %107 = vmatpush1.bf16.msra.mxu0 %v97
    %108 = vmatprep.subr.bf16.mxu0 0
    %109 = vmatpush1.bf16.msra.mxu0 %v96
    %110 = vmatprep.subr.bf16.mxu0 0
    %111 = vmatpush1.bf16.msra.mxu0 %v95
    %112 = vmatprep.subr.bf16.mxu0 0
    %113 = vmatpush1.bf16.msra.mxu0 %v94
    %114 = vmatprep.subr.bf16.mxu0 0
    %115 = vmatpush1.bf16.msra.mxu0 %v93
    %116 = vmatprep.subr.bf16.mxu0 0
    %117 = vmatpush1.bf16.msra.mxu0 %v92
    %118 = vmatprep.subr.bf16.mxu0 0
    %119 = vmatpush1.bf16.msra.mxu0 %v91
    %120 = vmatprep.subr.bf16.mxu0 0
    %121 = vmatpush1.bf16.msra.mxu0 %v90
    %122 = vmatprep.subr.bf16.mxu0 0
    %123 = vmatpush2.bf16.msra.mxu0 0
    %124 = vmatprep.subr.bf16.mxu0 0
    %125 = vmatpush2.bf16.msra.mxu0 0
    %126 = vmatprep.subr.bf16.mxu0 0
    %127 = vmatpush2.bf16.msra.mxu0 0
    %128 = vmatprep.subr.bf16.mxu0 0
    %129 = vmatpush2.bf16.msra.mxu0 0
    %130 = vmatprep.subr.bf16.mxu0 0
    %131 = vmatpush2.bf16.msra.mxu0 0
    %132 = vmatprep.subr.bf16.mxu0 0
    %133 = vmatpush2.bf16.msra.mxu0 0
    %134 = vmatprep.subr.bf16.mxu0 0
    %135 = vmatpush2.bf16.msra.mxu0 0
    %136 = vmatprep.subr.bf16.mxu0 0
    %137 = vmatpush2.bf16.msra.mxu0 0
    %138 = vmatprep.mubr.bf16.mxu0 0
    %139 = vmatmul.mubr.bf16.gmra.mxu0 %v34
    %v140 = vpop.f32.mrf.mxu0
    %v141 = vadd.f32 %v56, %v140
    %v142 = vpop.f32.mrf.mxu0
    %v143 = vpop.f32.mrf.mxu0
    %v144 = vpop.f32.mrf.mxu0
    %145 = vdwg.mxu0
    %146 = vst [vmem:[#allocation6] sm:$0xff] %v141
    %147 = vmax.xlane.f32.xlu0 %v141
    %v148 = vpop.xlane.xlu0 %147
    %v149 = vsub.f32 %v141, %v148
    %v150 = vmul.f32 %v149, 1.442695
    %v151 = vpow.pop %v150
    %152 = vadd.xlane.f32.xlu0 %v151
    %v153 = vpop.xlane.xlu0 %152
    %v154 = vrcp.pop %v153
    %v155 = vmul.f32 %v151, %v154
    %156 = vst [vmem:[#allocation5] sm:$0xff] %v155
    // Predicated region
    $region18: #{classifier_forward.1} parent=1 // pred_check
      _
    $region19: #{classifier_forward.1} parent=1 // pred_check_branch
      %158 = sbr.rel (0) target = $region21
    $region20: #{classifier_forward.1} parent=1 // pred_region
      %s160 = ssub.s32 128, 128
      %161 = vsyncadd [#allocation4], %s160
      %s163 = sshll.u32 [#allocation5], 4
      %s164 = int_to_ptr.vmem [resolvable:$true] %s163
      %166 = dma.vmem_to_hbm [thread:$0]  %s164, 128, %s3, [#allocation4]
    $region21: #{classifier_forward.1} parent=1 // pred_fallthru
      _
    // Predicated region
    $region22: #{classifier_forward.1} parent=1 // pred_check
      _
    $region23: #{classifier_forward.1} parent=1 // pred_check_branch
      %168 = sbr.rel (0) target = $region25
    $region24: #{classifier_forward.1} parent=1 // pred_region
      %s170 = ssub.s32 128, 128
      %171 = vsyncadd [#allocation7], %s170
      %s173 = sshll.u32 [#allocation6], 4
      %s174 = int_to_ptr.vmem [resolvable:$true] %s173
      %176 = dma.vmem_to_hbm [thread:$0]  %s174, 128, %s4, [#allocation7]
    $region25: #{classifier_forward.1} parent=1 // pred_fallthru
      _
    // Predicated region
    $region26: #{classifier_forward.1} parent=1 // pred_check
      _
    $region27: #{classifier_forward.1} parent=1 // pred_check_branch
      %178 = sbr.rel (0) target = $region29
    $region28: #{classifier_forward.1} parent=1 // pred_region
      %179 = dma.done [#allocation4], 128
    $region29: #{classifier_forward.1} parent=1 // pred_fallthru
      _
    // Predicated region
    $region30: #{classifier_forward.1} parent=1 // pred_check
      _
    $region31: #{classifier_forward.1} parent=1 // pred_check_branch
      %181 = sbr.rel (0) target = $region33
    $region32: #{classifier_forward.1} parent=1 // pred_region
      %182 = dma.done [#allocation7], 128
    $region33: #{classifier_forward.1} parent=1 // pred_fallthru
      _
    %183 = vsyncpa [#allocation3], 1
    %184 = vsyncpa [#allocation4], 1
    %185 = vsyncpa [#allocation7], 1

</llo_original>
